<compile_context>
chip_gen: v6e
topology: v6e:2x2x1
jax: 0.10.0
libtpu: 0.0.40
codegen_flags: <defaults>
</compile_context>

<pallas_src>
import functools

import jax
import jax.numpy as jnp
from jax.experimental import pallas as pl
from jax.experimental.pallas import tpu as pltpu

EMBED_DIM = 72        # CFG.image_embedding
PROJ_DIM = 256        # CFG.projection_dim (fc1 requires 256)
LN_EPS = 1e-5
_INV_SQRT2 = 0.7071067811865476


def _projection_head_kernel(
    x_ref,        # [TB, E]   bf16 row tile
    wp_ref,       # [E, P]    bf16 projection weight (VMEM-resident)
    bp_ref,       # [1, P]    f32 projection bias
    wf_ref,       # [P, P]    bf16 fc weight (VMEM-resident)
    bf_ref,       # [1, P]    f32 fc bias
    g_ref,        # [1, P]    f32 layer_norm gamma
    b_ref,        # [1, P]    f32 layer_norm beta
    w1_ref,       # [1, P]    f32 fc1 weight as a lane row
    b1_ref,       # [1, 1]    f32 fc1 bias (SMEM scalar)
    out_x_ref,    # [TB, P]   f32
    out_z_ref,    # [TB, 1]   f32
    *,
    approx_gelu: bool,
):
    # --- projection: bf16 MXU operands (K = 72, masked), f32 accumulation ----
    projected = (
        jnp.dot(x_ref[...], wp_ref[...], preferred_element_type=jnp.float32)
        + bp_ref[...]
    )

    if approx_gelu:
        # tanh GELU -> transcendental lands on the EUP slot (VALU relief).
        h = jax.nn.gelu(projected, approximate=True)
    else:
        # exact GELU (matches torch.nn.GELU() default, erf formulation), f32
        h = 0.5 * projected * (1.0 + jax.lax.erf(projected * _INV_SQRT2))

    # --- fc: bf16 MXU operands, f32 accumulation ------------------------------
    h = (
        jnp.dot(h.astype(jnp.bfloat16), wf_ref[...],
                preferred_element_type=jnp.float32)
        + bf_ref[...]
    )

    # dropout: identity at inference

    # residual
    h = h + projected

    # LayerNorm over last dim (biased variance, eps=1e-5), f32
    mean = jnp.mean(h, axis=-1, keepdims=True)
    centered = h - mean
    var = jnp.mean(centered * centered, axis=-1, keepdims=True)
    x_ln = centered * jax.lax.rsqrt(var + LN_EPS) * g_ref[...] + b_ref[...]

    out_x_ref[...] = x_ln.astype(out_x_ref.dtype)

    # z = x_ln @ w1 + b1  -> VPU multiply + lane reduce (avoids N=1 MXU matmul)
    z = jnp.sum(x_ln * w1_ref[...], axis=-1, keepdims=True) + b1_ref[0, 0]
    out_z_ref[...] = z.astype(out_z_ref.dtype)


def prepare_params(params):
    """One-time weight preparation (bf16 cast / row reshapes).

    Do this once and reuse: it removes all per-call weight casting/padding HBM
    traffic and extra XLA ops from the inference hot path."""
    P = params["w_proj"].shape[1]
    return {
        "w_proj": params["w_proj"].astype(jnp.bfloat16),                 # (E, P)
        "b_proj": params["b_proj"].reshape(1, P).astype(jnp.float32),
        "w_fc": params["w_fc"].astype(jnp.bfloat16),                     # (P, P)
        "b_fc": params["b_fc"].reshape(1, P).astype(jnp.float32),
        "ln_gamma": params["ln_gamma"].reshape(1, P).astype(jnp.float32),
        "ln_beta": params["ln_beta"].reshape(1, P).astype(jnp.float32),
        "w_fc1_row": params["w_fc1"].reshape(1, P).astype(jnp.float32),
        "b_fc1": params["b_fc1"].reshape(1, 1).astype(jnp.float32),
    }


def _round_up(v, m):
    return ((v + m - 1) // m) * m


def _choose_tile(B, max_rows_per_tile):
    """Pick the batch-row tile size.

    * B <= 16: single full-batch tile (full-dim block, no alignment issue).
    * B >= 32: at least 2 tiles so both v7x TensorCores get work, tiles sized
      to split B as evenly as possible, rounded up to 16 rows (bf16 sublane
      packing of the x tile).
    """
    if B <= 16:
        return B, 1
    n_tiles = max(2, pl.cdiv(B, max_rows_per_tile))
    tb = _round_up(pl.cdiv(B, n_tiles), 16)
    return tb, pl.cdiv(B, tb)


def projection_head(x, prepared, *, max_rows_per_tile=1024, approx_gelu=False):
    """x: [B, E] (ideally bf16; f32 accepted).  prepared: prepare_params(...).

    Returns (x_out [B, P] f32, z [B, 1] f32)."""
    if x.dtype != jnp.bfloat16:
        # Callers should pass bf16 to avoid this extra pass over x.
        x = x.astype(jnp.bfloat16)

    B, E = x.shape
    P = prepared["w_proj"].shape[1]

    TB, n_tiles = _choose_tile(B, max_rows_per_tile)
    grid = (n_tiles,)

    in_specs = [
        pl.BlockSpec((TB, E), lambda i: (i, 0)),               # x row tile (bf16)
        pl.BlockSpec((E, P), lambda i: (0, 0)),                # w_proj (resident)
        pl.BlockSpec((1, P), lambda i: (0, 0)),                # b_proj
        pl.BlockSpec((P, P), lambda i: (0, 0)),                # w_fc (resident)
        pl.BlockSpec((1, P), lambda i: (0, 0)),                # b_fc
        pl.BlockSpec((1, P), lambda i: (0, 0)),                # ln gamma
        pl.BlockSpec((1, P), lambda i: (0, 0)),                # ln beta
        pl.BlockSpec((1, P), lambda i: (0, 0)),                # fc1 weight row
        pl.BlockSpec(memory_space=pltpu.MemorySpace.SMEM),     # fc1 bias scalar
    ]
    out_specs = (
        pl.BlockSpec((TB, P), lambda i: (i, 0)),
        pl.BlockSpec((TB, 1), lambda i: (i, 0)),
    )

    kernel = functools.partial(_projection_head_kernel, approx_gelu=approx_gelu)

    out_x, out_z = pl.pallas_call(
        kernel,
        grid=grid,
        in_specs=in_specs,
        out_specs=out_specs,
        out_shape=(
            jax.ShapeDtypeStruct((B, P), jnp.float32),
            jax.ShapeDtypeStruct((B, 1), jnp.float32),
        ),
        compiler_params=pltpu.CompilerParams(
            dimension_semantics=("parallel",),   # shard row tiles across v7x TCs
            # TB=1024 live footprint is only ~7 MiB (x/out double buffers +
            # ~4 f32 [TB,256] temporaries + resident weights) -> well inside
            # 32 MiB scoped VMEM even on the 64 MiB v7x generation.
            vmem_limit_bytes=32 * 1024 * 1024,
        ),
    )(
        x,
        prepared["w_proj"], prepared["b_proj"],
        prepared["w_fc"], prepared["b_fc"],
        prepared["ln_gamma"], prepared["ln_beta"],
        prepared["w_fc1_row"], prepared["b_fc1"],
    )

    return out_x, out_z


def init_params(key, embedding_dim=EMBED_DIM, projection_dim=PROJ_DIM):
    """Deterministic synthetic init mimicking nn.Linear's U(-1/sqrt(fan_in), ...)."""
    ks = jax.random.split(key, 6)

    def lin(kw, kb, fan_in, fan_out):
        bound = 1.0 / jnp.sqrt(fan_in)
        w = jax.random.uniform(kw, (fan_in, fan_out), jnp.float32, -bound, bound)
        b = jax.random.uniform(kb, (1, fan_out), jnp.float32, -bound, bound)
        return w, b

    w_proj, b_proj = lin(ks[0], ks[1], embedding_dim, projection_dim)
    w_fc, b_fc = lin(ks[2], ks[3], projection_dim, projection_dim)
    w_fc1, b_fc1 = lin(ks[4], ks[5], projection_dim, 1)

    return {
        "w_proj": w_proj, "b_proj": b_proj,
        "w_fc": w_fc, "b_fc": b_fc,
        "ln_gamma": jnp.ones((1, projection_dim), jnp.float32),
        "ln_beta": jnp.zeros((1, projection_dim), jnp.float32),
        "w_fc1": w_fc1, "b_fc1": b_fc1,
    }


def projection_head_ref(x, p):
    """Pure-JAX f32 reference (matches the PyTorch module)."""
    projected = x @ p["w_proj"] + p["b_proj"]
    h = jax.nn.gelu(projected, approximate=False)
    h = h @ p["w_fc"] + p["b_fc"]
    h = h + projected
    mean = jnp.mean(h, axis=-1, keepdims=True)
    var = jnp.mean((h - mean) ** 2, axis=-1, keepdims=True)
    x_ln = (h - mean) * jax.lax.rsqrt(var + LN_EPS) * p["ln_gamma"] + p["ln_beta"]
    z = x_ln @ p["w_fc1"] + p["b_fc1"]
    return x_ln, z


if __name__ == "__main__":
    key = jax.random.PRNGKey(0)
    k_x, k_p = jax.random.split(key)

    B = 8  # CFG.batch_size
    x = jax.random.normal(k_x, (B, EMBED_DIM), jnp.float32)
    params = init_params(k_p)
    prepared = prepare_params(params)   # one-time weight prep (bf16 cast)

    # Pass x in bf16 (the intended zero-extra-pass hot path).
    out_x, out_z = projection_head(x.astype(jnp.bfloat16), prepared)
    jax.block_until_ready((out_x, out_z))

    ref_x, ref_z = projection_head_ref(x, params)
    assert out_x.shape == (B, PROJ_DIM) and out_z.shape == (B, 1)
    # bf16 MXU operands / bf16 x (f32 accumulation) -> slightly looser tolerance
    # than a pure-f32 comparison; LayerNorm keeps outputs O(1).
    assert jnp.allclose(out_x, ref_x, atol=5e-2, rtol=5e-2)
    assert jnp.allclose(out_z, ref_z, atol=5e-2, rtol=5e-2)

    print("KERNEL_OK")
</pallas_src>

<mosaic_0001>
module attributes {stable_mosaic.version = 11 : i64} {
  func.func @_projection_head_kernel(%arg0: i32, %arg1: memref<8x72xbf16, #tpu.memory_space<vmem>>, %arg2: memref<72x256xbf16, #tpu.memory_space<vmem>>, %arg3: memref<1x256xf32, #tpu.memory_space<vmem>>, %arg4: memref<256x256xbf16, #tpu.memory_space<vmem>>, %arg5: memref<1x256xf32, #tpu.memory_space<vmem>>, %arg6: memref<1x256xf32, #tpu.memory_space<vmem>>, %arg7: memref<1x256xf32, #tpu.memory_space<vmem>>, %arg8: memref<1x256xf32, #tpu.memory_space<vmem>>, %arg9: memref<1x1xf32, #tpu.memory_space<smem>>, %arg10: memref<8x256xf32, #tpu.memory_space<vmem>>, %arg11: memref<8x1xf32, #tpu.memory_space<vmem>>) attributes {dimension_semantics = [#tpu.dimension_semantics<parallel>], iteration_bounds = array<i64: 1>, scalar_prefetch = 0 : i64, scratch_operands = 0 : i64, tpu.core_type = #tpu.core_type<tc>, window_params = [{transform_indices = @transform_0, window_bounds = array<i64: 8, 72>}, {pipeline_mode = #tpu.pipeline_mode<synchronous>, transform_indices = @transform_1, window_bounds = array<i64: 72, 256>}, {pipeline_mode = #tpu.pipeline_mode<synchronous>, transform_indices = @transform_2, window_bounds = array<i64: 1, 256>}, {pipeline_mode = #tpu.pipeline_mode<synchronous>, transform_indices = @transform_3, window_bounds = array<i64: 256, 256>}, {pipeline_mode = #tpu.pipeline_mode<synchronous>, transform_indices = @transform_4, window_bounds = array<i64: 1, 256>}, {pipeline_mode = #tpu.pipeline_mode<synchronous>, transform_indices = @transform_5, window_bounds = array<i64: 1, 256>}, {pipeline_mode = #tpu.pipeline_mode<synchronous>, transform_indices = @transform_6, window_bounds = array<i64: 1, 256>}, {pipeline_mode = #tpu.pipeline_mode<synchronous>, transform_indices = @transform_7, window_bounds = array<i64: 1, 256>}, {transform_indices = @transform_8, window_bounds = array<i64: 1, 1>}, {transform_indices = @transform_9, window_bounds = array<i64: 8, 256>}, {transform_indices = @transform_10, window_bounds = array<i64: 8, 1>}]} {
    %c0 = arith.constant 0 : index
    %c0_0 = arith.constant 0 : index
    %0 = vector.load %arg1[%c0, %c0_0] : memref<8x72xbf16, #tpu.memory_space<vmem>>, vector<8x72xbf16>
    %c0_1 = arith.constant 0 : index
    %c0_2 = arith.constant 0 : index
    %1 = vector.load %arg2[%c0_1, %c0_2] : memref<72x256xbf16, #tpu.memory_space<vmem>>, vector<72x256xbf16>
    %cst = arith.constant dense<0.000000e+00> : vector<8x256xf32>
    %2 = tpu.matmul %0, %1, %cst {dimension_numbers = #tpu.dot_dimension_numbers<[1], [0], [0], [1], [0, 0, 1, 1], [], []>} : vector<8x72xbf16>, vector<72x256xbf16>, vector<8x256xf32> -> vector<8x256xf32>
    %c0_3 = arith.constant 0 : index
    %c0_4 = arith.constant 0 : index
    %3 = vector.load %arg3[%c0_3, %c0_4] : memref<1x256xf32, #tpu.memory_space<vmem>>, vector<1x256xf32>
    %4 = vector.broadcast %3 : vector<1x256xf32> to vector<8x256xf32>
    %5 = arith.addf %2, %4 : vector<8x256xf32>
    %cst_5 = arith.constant 5.000000e-01 : f32
    %6 = vector.broadcast %cst_5 : f32 to vector<8x256xf32>
    %7 = arith.mulf %6, %5 : vector<8x256xf32>
    %cst_6 = arith.constant 0.707106769 : f32
    %8 = vector.broadcast %cst_6 : f32 to vector<8x256xf32>
    %9 = arith.mulf %5, %8 : vector<8x256xf32>
    %10 = math.erf %9 : vector<8x256xf32>
    %cst_7 = arith.constant 1.000000e+00 : f32
    %11 = vector.broadcast %cst_7 : f32 to vector<8x256xf32>
    %12 = arith.addf %11, %10 : vector<8x256xf32>
    %13 = arith.mulf %7, %12 : vector<8x256xf32>
    %14 = arith.truncf %13 : vector<8x256xf32> to vector<8x256xbf16>
    %c0_8 = arith.constant 0 : index
    %c0_9 = arith.constant 0 : index
    %15 = vector.load %arg4[%c0_8, %c0_9] : memref<256x256xbf16, #tpu.memory_space<vmem>>, vector<256x256xbf16>
    %cst_10 = arith.constant dense<0.000000e+00> : vector<8x256xf32>
    %16 = tpu.matmul %14, %15, %cst_10 {dimension_numbers = #tpu.dot_dimension_numbers<[1], [0], [0], [1], [0, 0, 1, 1], [], []>} : vector<8x256xbf16>, vector<256x256xbf16>, vector<8x256xf32> -> vector<8x256xf32>
    %c0_11 = arith.constant 0 : index
    %c0_12 = arith.constant 0 : index
    %17 = vector.load %arg5[%c0_11, %c0_12] : memref<1x256xf32, #tpu.memory_space<vmem>>, vector<1x256xf32>
    %18 = vector.broadcast %17 : vector<1x256xf32> to vector<8x256xf32>
    %19 = arith.addf %16, %18 : vector<8x256xf32>
    %20 = arith.addf %19, %5 : vector<8x256xf32>
    %cst_13 = arith.constant dense<0.000000e+00> : vector<8xf32>
    %21 = vector.multi_reduction <add>, %20, %cst_13 [1] : vector<8x256xf32> to vector<8xf32>
    %22 = vector.shape_cast %21 : vector<8xf32> to vector<8x1xf32>
    %cst_14 = arith.constant 2.560000e+02 : f32
    %23 = vector.broadcast %cst_14 : f32 to vector<8x1xf32>
    %24 = arith.divf %22, %23 : vector<8x1xf32>
    %25 = vector.broadcast %24 : vector<8x1xf32> to vector<8x256xf32>
    %26 = arith.subf %20, %25 : vector<8x256xf32>
    %27 = arith.mulf %26, %26 : vector<8x256xf32>
    %cst_15 = arith.constant dense<0.000000e+00> : vector<8xf32>
    %28 = vector.multi_reduction <add>, %27, %cst_15 [1] : vector<8x256xf32> to vector<8xf32>
    %29 = vector.shape_cast %28 : vector<8xf32> to vector<8x1xf32>
    %cst_16 = arith.constant 2.560000e+02 : f32
    %30 = vector.broadcast %cst_16 : f32 to vector<8x1xf32>
    %31 = arith.divf %29, %30 : vector<8x1xf32>
    %cst_17 = arith.constant 9.99999974E-6 : f32
    %32 = vector.broadcast %cst_17 : f32 to vector<8x1xf32>
    %33 = arith.addf %31, %32 : vector<8x1xf32>
    %34 = math.rsqrt %33 : vector<8x1xf32>
    %35 = vector.broadcast %34 : vector<8x1xf32> to vector<8x256xf32>
    %36 = arith.mulf %26, %35 : vector<8x256xf32>
    %c0_18 = arith.constant 0 : index
    %c0_19 = arith.constant 0 : index
    %37 = vector.load %arg6[%c0_18, %c0_19] : memref<1x256xf32, #tpu.memory_space<vmem>>, vector<1x256xf32>
    %38 = vector.broadcast %37 : vector<1x256xf32> to vector<8x256xf32>
    %39 = arith.mulf %36, %38 : vector<8x256xf32>
    %c0_20 = arith.constant 0 : index
    %c0_21 = arith.constant 0 : index
    %40 = vector.load %arg7[%c0_20, %c0_21] : memref<1x256xf32, #tpu.memory_space<vmem>>, vector<1x256xf32>
    %41 = vector.broadcast %40 : vector<1x256xf32> to vector<8x256xf32>
    %42 = arith.addf %39, %41 : vector<8x256xf32>
    %c0_22 = arith.constant 0 : index
    %c0_23 = arith.constant 0 : index
    %43 = vector.load %arg10[%c0_22, %c0_23] : memref<8x256xf32, #tpu.memory_space<vmem>>, vector<8x256xf32>
    tpu.vector_store %arg10[%c0_22, %c0_23], %42 {strides = array<i32>} : memref<8x256xf32, #tpu.memory_space<vmem>>, vector<8x256xf32>,
    %c0_24 = arith.constant 0 : index
    %c0_25 = arith.constant 0 : index
    %44 = vector.load %arg8[%c0_24, %c0_25] : memref<1x256xf32, #tpu.memory_space<vmem>>, vector<1x256xf32>
    %45 = vector.broadcast %44 : vector<1x256xf32> to vector<8x256xf32>
    %46 = arith.mulf %42, %45 : vector<8x256xf32>
    %cst_26 = arith.constant dense<0.000000e+00> : vector<8xf32>
    %47 = vector.multi_reduction <add>, %46, %cst_26 [1] : vector<8x256xf32> to vector<8xf32>
    %48 = vector.shape_cast %47 : vector<8xf32> to vector<8x1xf32>
    %c0_27 = arith.constant 0 : index
    %c0_28 = arith.constant 0 : index
    %49 = memref.load %arg9[%c0_27, %c0_28] : memref<1x1xf32, #tpu.memory_space<smem>>
    %50 = vector.broadcast %49 : f32 to vector<8x1xf32>
    %51 = arith.addf %48, %50 : vector<8x1xf32>
    %c0_29 = arith.constant 0 : index
    %c0_30 = arith.constant 0 : index
    %52 = vector.load %arg11[%c0_29, %c0_30] : memref<8x1xf32, #tpu.memory_space<vmem>>, vector<8x1xf32>
    tpu.vector_store %arg11[%c0_29, %c0_30], %51 {strides = array<i32>} : memref<8x1xf32, #tpu.memory_space<vmem>>, vector<8x1xf32>,
    return
  }
  func.func @transform_0(%arg0: i32) -> (i32, i32) {
    %c0_i32 = arith.constant 0 : i32
    %c0_i32_0 = arith.constant 0 : i32
    return %arg0, %c0_i32 : i32, i32
  }
  func.func @transform_1(%arg0: i32) -> (i32, i32) {
    %c0_i32 = arith.constant 0 : i32
    %c0_i32_0 = arith.constant 0 : i32
    %c0_i32_1 = arith.constant 0 : i32
    return %c0_i32, %c0_i32_0 : i32, i32
  }
  func.func @transform_2(%arg0: i32) -> (i32, i32) {
    %c0_i32 = arith.constant 0 : i32
    %c0_i32_0 = arith.constant 0 : i32
    %c0_i32_1 = arith.constant 0 : i32
    return %c0_i32, %c0_i32_0 : i32, i32
  }
  func.func @transform_3(%arg0: i32) -> (i32, i32) {
    %c0_i32 = arith.constant 0 : i32
    %c0_i32_0 = arith.constant 0 : i32
    %c0_i32_1 = arith.constant 0 : i32
    return %c0_i32, %c0_i32_0 : i32, i32
  }
  func.func @transform_4(%arg0: i32) -> (i32, i32) {
    %c0_i32 = arith.constant 0 : i32
    %c0_i32_0 = arith.constant 0 : i32
    %c0_i32_1 = arith.constant 0 : i32
    return %c0_i32, %c0_i32_0 : i32, i32
  }
  func.func @transform_5(%arg0: i32) -> (i32, i32) {
    %c0_i32 = arith.constant 0 : i32
    %c0_i32_0 = arith.constant 0 : i32
    %c0_i32_1 = arith.constant 0 : i32
    return %c0_i32, %c0_i32_0 : i32, i32
  }
  func.func @transform_6(%arg0: i32) -> (i32, i32) {
    %c0_i32 = arith.constant 0 : i32
    %c0_i32_0 = arith.constant 0 : i32
    %c0_i32_1 = arith.constant 0 : i32
    return %c0_i32, %c0_i32_0 : i32, i32
  }
  func.func @transform_7(%arg0: i32) -> (i32, i32) {
    %c0_i32 = arith.constant 0 : i32
    %c0_i32_0 = arith.constant 0 : i32
    %c0_i32_1 = arith.constant 0 : i32
    return %c0_i32, %c0_i32_0 : i32, i32
  }
  func.func @transform_8(%arg0: i32) -> (i32, i32) {
    %c0_i32 = arith.constant 0 : i32
    %c0_i32_0 = arith.constant 0 : i32
    %c0_i32_1 = arith.constant 0 : i32
    return %c0_i32, %c0_i32_0 : i32, i32
  }
  func.func @transform_9(%arg0: i32) -> (i32, i32) {
    %c0_i32 = arith.constant 0 : i32
    %c0_i32_0 = arith.constant 0 : i32
    return %arg0, %c0_i32 : i32, i32
  }
  func.func @transform_10(%arg0: i32) -> (i32, i32) {
    %c0_i32 = arith.constant 0 : i32
    %c0_i32_0 = arith.constant 0 : i32
    return %arg0, %c0_i32 : i32, i32
  }
}

</mosaic_0001>

<llo_original>
// kernel: tpu_custom_call.1
$region0: #{tpu_custom_call.1}
  #allocation0 [shape = 'u32[]', space=smem, size = 0x4, offset = 0x4, fixed_abs, tag = 'smem constant byte address 0x4 - core index']
  #allocation1 [shape = 'u32[144,128]{1,0:T(1,128)}', space=vmem, size = 0x12000, scoped, tag = 'internal scratch']
  #allocation2 [shape = 'f32[1,1]{1,0:T(1,128)S(6)}', space=smem, size = 0x200, scoped, tag = 'scoped memory for tpu_custom_call.1']
  %s0 = inlined_call_operand.hbm [shape: bf16[8,72], index: 0, kind: input, shape index: {}]
  %s1 = inlined_call_operand.hbm [shape: bf16[72,256], index: 1, kind: input, shape index: {}]
  %s2 = inlined_call_operand.vmem [shape: f32[1,256], index: 2, kind: input, shape index: {}]
  %s3 = inlined_call_operand.hbm [shape: bf16[256,256], index: 3, kind: input, shape index: {}]
  %s4 = inlined_call_operand.vmem [shape: f32[1,256], index: 4, kind: input, shape index: {}]
  %s5 = inlined_call_operand.vmem [shape: f32[1,256], index: 5, kind: input, shape index: {}]
  %s6 = inlined_call_operand.vmem [shape: f32[1,256], index: 6, kind: input, shape index: {}]
  %s7 = inlined_call_operand.vmem [shape: f32[1,256], index: 7, kind: input, shape index: {}]
  %s8 = inlined_call_operand.<no memory space> [shape: f32[1,1], index: 8, kind: input, shape index: {}]
  %s9 = inlined_call_operand.hbm [shape: f32[8,256], index: 9, kind: output, shape index: {0}]
  %s10 = inlined_call_operand.vmem [shape: f32[8,1], index: 10, kind: output, shape index: {1}]
  %11 = xla_tuple %s9, %s10
  %s12 = sld [smem:[#allocation0]]
  $region66: #{tpu_custom_call.1} parent=0
    _
  %s14 = ssub.s32 1, %s12
  %s15 = scalar_select 0, %s14, %s12
  %16 = sst [smem:[#allocation2]] %s8
  $region1: #{tpu_custom_call.1} parent=0
    #allocation3 [shape = 'u8[2048]{0}', space=vmem, size = 0x800, scoped, tag = 'input window, operand 0, single buffered']
    #allocation4 [shape = 's32[1]{0}', space=sflag, size = 0x4, scoped, tag = 'scoped memory for tpu_custom_call.1']
    #allocation5 [shape = 's32[1]{0}', space=sflag, size = 0x4, scoped, tag = 'scoped memory for tpu_custom_call.1']
    #allocation6 [shape = 'u8[36864]{0}', space=vmem, size = 0x9000, scoped, tag = 'input window, operand 1, single buffered']
    #allocation7 [shape = 's32[1]{0}', space=sflag, size = 0x4, scoped, tag = 'scoped memory for tpu_custom_call.1']
    #allocation8 [shape = 'u8[131072]{0}', space=vmem, size = 0x20000, scoped, tag = 'input window, operand 3, single buffered']
    #allocation9 [shape = 'u8[8192]{0}', space=vmem, size = 0x2000, scoped, tag = 'output window, operand 0, single buffered']
    %17 = vsyncpa [#allocation4], 0
    %18 = vsyncpa [#allocation7], 0
    %19 = vsyncpa [#allocation5], 0
    // Predicated region
    $region2: #{tpu_custom_call.1} parent=1 // pred_check
      _
    $region3: #{tpu_custom_call.1} parent=1 // pred_check_branch
      %21 = sbr.rel (0) target = $region5
    $region4: #{tpu_custom_call.1} parent=1 // pred_region
      %s23 = ssub.s32 64, 64
      %24 = vsyncadd [#allocation4], %s23
      %s26 = sshll.u32 [#allocation3], 4
      %s27 = int_to_ptr.vmem [resolvable:$true] %s26
      %29 = dma.hbm_to_vmem [thread:$0]  %s0, 64, %s27, [#allocation4]
    $region5: #{tpu_custom_call.1} parent=1 // pred_fallthru
      _
    // Predicated region
    $region6: #{tpu_custom_call.1} parent=1 // pred_check
      _
    $region7: #{tpu_custom_call.1} parent=1 // pred_check_branch
      %31 = sbr.rel (0) target = $region9
    $region8: #{tpu_custom_call.1} parent=1 // pred_region
      %s33 = ssub.s32 1152, 1152
      %34 = vsyncadd [#allocation7], %s33
      %s35 = sshll.u32 [#allocation6], 4
      %s36 = int_to_ptr.vmem [resolvable:$true] %s35
      %41 = dma.hbm_to_vmem [thread:$0]  %s1, 1152, %s36, [#allocation7], 128, 128, 8
    $region9: #{tpu_custom_call.1} parent=1 // pred_fallthru
      _
    // Predicated region
    $region10: #{tpu_custom_call.1} parent=1 // pred_check
      _
    $region11: #{tpu_custom_call.1} parent=1 // pred_check_branch
      %43 = sbr.rel (0) target = $region13
    $region12: #{tpu_custom_call.1} parent=1 // pred_region
      _
    $region13: #{tpu_custom_call.1} parent=1 // pred_fallthru
      _
    // Predicated region
    $region14: #{tpu_custom_call.1} parent=1 // pred_check
      _
    $region15: #{tpu_custom_call.1} parent=1 // pred_check_branch
      %45 = sbr.rel (0) target = $region17
    $region16: #{tpu_custom_call.1} parent=1 // pred_region
      %s47 = ssub.s32 4096, 4096
      %48 = vsyncadd [#allocation7], %s47
      %s49 = sshll.u32 [#allocation8], 4
      %s50 = int_to_ptr.vmem [resolvable:$true] %s49
      %55 = dma.hbm_to_vmem [thread:$0]  %s3, 4096, %s50, [#allocation7], 128, 128, 8
    $region17: #{tpu_custom_call.1} parent=1 // pred_fallthru
      _
    // Predicated region
    $region18: #{tpu_custom_call.1} parent=1 // pred_check
      _
    $region19: #{tpu_custom_call.1} parent=1 // pred_check_branch
      %57 = sbr.rel (0) target = $region21
    $region20: #{tpu_custom_call.1} parent=1 // pred_region
      _
    $region21: #{tpu_custom_call.1} parent=1 // pred_fallthru
      _
    // Predicated region
    $region22: #{tpu_custom_call.1} parent=1 // pred_check
      _
    $region23: #{tpu_custom_call.1} parent=1 // pred_check_branch
      %59 = sbr.rel (0) target = $region25
    $region24: #{tpu_custom_call.1} parent=1 // pred_region
      _
    $region25: #{tpu_custom_call.1} parent=1 // pred_fallthru
      _
    // Predicated region
    $region26: #{tpu_custom_call.1} parent=1 // pred_check
      _
    $region27: #{tpu_custom_call.1} parent=1 // pred_check_branch
      %61 = sbr.rel (0) target = $region29
    $region28: #{tpu_custom_call.1} parent=1 // pred_region
      _
    $region29: #{tpu_custom_call.1} parent=1 // pred_fallthru
      _
    // Predicated region
    $region30: #{tpu_custom_call.1} parent=1 // pred_check
      _
    $region31: #{tpu_custom_call.1} parent=1 // pred_check_branch
      %63 = sbr.rel (0) target = $region33
    $region32: #{tpu_custom_call.1} parent=1 // pred_region
      _
    $region33: #{tpu_custom_call.1} parent=1 // pred_fallthru
      _
    // Predicated region
    $region34: #{tpu_custom_call.1} parent=1 // pred_check
      _
    $region35: #{tpu_custom_call.1} parent=1 // pred_check_branch
      %65 = sbr.rel (0) target = $region37
    $region36: #{tpu_custom_call.1} parent=1 // pred_region
      _
    $region37: #{tpu_custom_call.1} parent=1 // pred_fallthru
      _
    // Predicated region
    $region38: #{tpu_custom_call.1} parent=1 // pred_check
      _
    $region39: #{tpu_custom_call.1} parent=1 // pred_check_branch
      %67 = sbr.rel (0) target = $region41
    $region40: #{tpu_custom_call.1} parent=1 // pred_region
      %68 = dma.done [#allocation4], 64
    $region41: #{tpu_custom_call.1} parent=1 // pred_fallthru
      _
    // Predicated region
    $region42: #{tpu_custom_call.1} parent=1 // pred_check
      _
    $region43: #{tpu_custom_call.1} parent=1 // pred_check_branch
      %70 = sbr.rel (0) target = $region45
    $region44: #{tpu_custom_call.1} parent=1 // pred_region
      %71 = dma.done [#allocation7], 1152
    $region45: #{tpu_custom_call.1} parent=1 // pred_fallthru
      _
    // Predicated region
    $region46: #{tpu_custom_call.1} parent=1 // pred_check
      _
    $region47: #{tpu_custom_call.1} parent=1 // pred_check_branch
      %73 = sbr.rel (0) target = $region49
    $region48: #{tpu_custom_call.1} parent=1 // pred_region
      %74 = dma.done [#allocation7], 4096
    $region49: #{tpu_custom_call.1} parent=1 // pred_fallthru
      _
    %v76 = vld [vmem:[#allocation3] sm:$0xf]
    %v77 = vld [vmem:[#allocation6] sm:$0xff]
    %v78 = vld [vmem:[#allocation6 + $0x8] sm:$0xff]
    %v79 = vld [vmem:[#allocation6 + $0x10] sm:$0xff]
    %v80 = vld [vmem:[#allocation6 + $0x18] sm:$0xff]
    %v81 = vld [vmem:[#allocation6 + $0x20] sm:$0xff]
    %v82 = vld [vmem:[#allocation6 + $0x28] sm:$0xff]
    %v83 = vld [vmem:[#allocation6 + $0x30] sm:$0xff]
    %v84 = vld [vmem:[#allocation6 + $0x38] sm:$0xff]
    %v85 = vld [vmem:[#allocation6 + $0x40] sm:$0xff]
    %v86 = vld [vmem:[%s2] sm:$0x3]
    %v88 = vlaneseq
    %v89 = vshrl.u32 %v88, 7
    %v90 = vsub.s32 0, %v89
    %v91 = vrot.slane %v86, %v90
    %v92 = vlaneseq
    %v93 = vshrl.u32 %v92, 7
    %v94 = vsub.s32 1, %v93
    %v95 = vrot.slane %v86, %v94
    %v107 = vunpack.c.l.b16 %v77
    %v108 = vunpack.c.h.b16 %v77
    %v109 = vunpack.c.l.b16 %v78
    %v110 = vunpack.c.h.b16 %v78
    %v111 = vunpack.c.l.b16 %v79
    %v112 = vunpack.c.h.b16 %v79
    %v113 = vunpack.c.l.b16 %v80
    %v114 = vunpack.c.h.b16 %v80
    %v115 = vunpack.c.l.b16 %v81
    %v116 = vunpack.c.h.b16 %v81
    %v117 = vunpack.c.l.b16 %v82
    %v118 = vunpack.c.h.b16 %v82
    %v119 = vunpack.c.l.b16 %v83
    %v120 = vunpack.c.h.b16 %v83
    %v121 = vunpack.c.l.b16 %v84
    %v122 = vunpack.c.h.b16 %v84
    %v123 = vunpack.c.l.b16 %v85
    %v124 = vunpack.c.h.b16 %v85
    %v125 = vpack.c.b16 %v109, %v107
    %v126 = vpack.c.b16 %v110, %v108
    %v127 = vpack.c.b16 %v113, %v111
    %v128 = vpack.c.b16 %v114, %v112
    %v129 = vpack.c.b16 %v117, %v115
    %v130 = vpack.c.b16 %v118, %v116
    %v131 = vpack.c.b16 %v121, %v119
    %v132 = vpack.c.b16 %v122, %v120
    %v133 = vpack.c.b16 %v123, %v123
    %v134 = vpack.c.b16 %v124, %v124
    %vm143 = vcmask 588800
    %v145 = vsel %vm143, %v76, 0
    %vm147 = vcmask 1043456
    %v149 = vsel %vm147, %v133, 0
    %v152 = vsel %vm147, %v134, 0
    %154 = vmatprep.subr.bf16.mxu0 0
    %155 = vmatpush1.bf16.msra.mxu0 0
    %156 = vmatprep.subr.bf16.mxu0 0
    %157 = vmatpush1.bf16.msra.mxu0 0
    %158 = vmatprep.subr.bf16.mxu0 0
    %159 = vmatpush1.bf16.msra.mxu0 0
    %160 = vmatprep.subr.bf16.mxu0 %v152
    %161 = vmatpush1.bf16.msra.mxu0 %v149
    %162 = vmatprep.subr.bf16.mxu0 %v132
    %163 = vmatpush1.bf16.msra.mxu0 %v131
    %164 = vmatprep.subr.bf16.mxu0 %v130
    %165 = vmatpush1.bf16.msra.mxu0 %v129
    %166 = vmatprep.subr.bf16.mxu0 %v128
    %167 = vmatpush1.bf16.msra.mxu0 %v127
    %168 = vmatprep.subr.bf16.mxu0 %v126
    %169 = vmatpush1.bf16.msra.mxu0 %v125
    %170 = vmatprep.subr.bf16.mxu0 0
    %171 = vmatpush2.bf16.msra.mxu0 0
    %172 = vmatprep.subr.bf16.mxu0 0
    %173 = vmatpush2.bf16.msra.mxu0 0
    %174 = vmatprep.subr.bf16.mxu0 0
    %175 = vmatpush2.bf16.msra.mxu0 0
    %176 = vmatprep.subr.bf16.mxu0 0
    %177 = vmatpush2.bf16.msra.mxu0 0
    %178 = vmatprep.subr.bf16.mxu0 0
    %179 = vmatpush2.bf16.msra.mxu0 0
    %180 = vmatprep.subr.bf16.mxu0 0
    %181 = vmatpush2.bf16.msra.mxu0 0
    %182 = vmatprep.subr.bf16.mxu0 0
    %183 = vmatpush2.bf16.msra.mxu0 0
    %184 = vmatprep.subr.bf16.mxu0 0
    %185 = vmatpush2.bf16.msra.mxu0 0
    %186 = vmatprep.mubr.bf16.mxu0 0
    %187 = vmatmul.mubr.bf16.gmra.mxu0 %v145
    %v188 = vpop.f32.mrf.mxu0
    %v189 = vadd.f32 %v91, %v188
    %v190 = vpop.f32.mrf.mxu0
    %v191 = vadd.f32 %v95, %v190
    %v192 = vpop.f32.mrf.mxu0
    %v193 = vpop.f32.mrf.mxu0
    %194 = vdwg.mxu0
    %v195 = vmul.f32 %v189, 0.5
    %v196 = vmul.f32 %v191, 0.5
    %v197 = vmul.f32 %v189, 0.70710677
    %v198 = vmul.f32 %v191, 0.70710677
    %v199 = verf.f32.pop %v197
    %v200 = verf.f32.pop %v198
    %v201 = vadd.f32 %v199, 1.0
    %v202 = vadd.f32 %v200, 1.0
    %v203 = vmul.f32 %v195, %v201
    %v204 = vmul.f32 %v196, %v202
    %v205 = vpack.c.bf16 %v203, %v203
    %v206 = vpack.c.bf16 %v204, %v204
    %v207 = vld [vmem:[#allocation8] sm:$0xff]
    %v208 = vld [vmem:[#allocation8 + $0x8] sm:$0xff]
    %v209 = vld [vmem:[#allocation8 + $0x10] sm:$0xff]
    %v210 = vld [vmem:[#allocation8 + $0x18] sm:$0xff]
    %v211 = vld [vmem:[#allocation8 + $0x20] sm:$0xff]
    %v212 = vld [vmem:[#allocation8 + $0x28] sm:$0xff]
    %v213 = vld [vmem:[#allocation8 + $0x30] sm:$0xff]
    %v214 = vld [vmem:[#allocation8 + $0x38] sm:$0xff]
    %v215 = vld [vmem:[#allocation8 + $0x40] sm:$0xff]
    %v216 = vld [vmem:[#allocation8 + $0x48] sm:$0xff]
    %v217 = vld [vmem:[#allocation8 + $0x50] sm:$0xff]
    %v218 = vld [vmem:[#allocation8 + $0x58] sm:$0xff]
    %v219 = vld [vmem:[#allocation8 + $0x60] sm:$0xff]
    %v220 = vld [vmem:[#allocation8 + $0x68] sm:$0xff]
    %v221 = vld [vmem:[#allocation8 + $0x70] sm:$0xff]
    %v222 = vld [vmem:[#allocation8 + $0x78] sm:$0xff]
    %v223 = vld [vmem:[#allocation8 + $0x80] sm:$0xff]
    %v224 = vld [vmem:[#allocation8 + $0x88] sm:$0xff]
    %v225 = vld [vmem:[#allocation8 + $0x90] sm:$0xff]
    %v226 = vld [vmem:[#allocation8 + $0x98] sm:$0xff]
    %v227 = vld [vmem:[#allocation8 + $0xa0] sm:$0xff]
    %v228 = vld [vmem:[#allocation8 + $0xa8] sm:$0xff]
    %v229 = vld [vmem:[#allocation8 + $0xb0] sm:$0xff]
    %v230 = vld [vmem:[#allocation8 + $0xb8] sm:$0xff]
    %v231 = vld [vmem:[#allocation8 + $0xc0] sm:$0xff]
    %v232 = vld [vmem:[#allocation8 + $0xc8] sm:$0xff]
    %v233 = vld [vmem:[#allocation8 + $0xd0] sm:$0xff]
    %v234 = vld [vmem:[#allocation8 + $0xd8] sm:$0xff]
    %v235 = vld [vmem:[#allocation8 + $0xe0] sm:$0xff]
    %v236 = vld [vmem:[#allocation8 + $0xe8] sm:$0xff]
    %v237 = vld [vmem:[#allocation8 + $0xf0] sm:$0xff]
    %v238 = vld [vmem:[#allocation8 + $0xf8] sm:$0xff]
    %v239 = vld [vmem:[%s4] sm:$0x3]
    %v241 = vlaneseq
    %v242 = vshrl.u32 %v241, 7
    %v243 = vsub.s32 0, %v242
    %v244 = vrot.slane %v239, %v243
    %v245 = vlaneseq
    %v246 = vshrl.u32 %v245, 7
    %v247 = vsub.s32 1, %v246
    %v248 = vrot.slane %v239, %v247
    %v283 = vunpack.c.l.b16 %v207
    %v284 = vunpack.c.h.b16 %v207
    %v285 = vunpack.c.l.b16 %v208
    %v286 = vunpack.c.h.b16 %v208
    %v287 = vunpack.c.l.b16 %v209
    %v288 = vunpack.c.h.b16 %v209
    %v289 = vunpack.c.l.b16 %v210
    %v290 = vunpack.c.h.b16 %v210
    %v291 = vunpack.c.l.b16 %v211
    %v292 = vunpack.c.h.b16 %v211
    %v293 = vunpack.c.l.b16 %v212
    %v294 = vunpack.c.h.b16 %v212
    %v295 = vunpack.c.l.b16 %v213
    %v296 = vunpack.c.h.b16 %v213
    %v297 = vunpack.c.l.b16 %v214
    %v298 = vunpack.c.h.b16 %v214
    %v299 = vunpack.c.l.b16 %v215
    %v300 = vunpack.c.h.b16 %v215
    %v301 = vunpack.c.l.b16 %v216
    %v302 = vunpack.c.h.b16 %v216
    %v303 = vunpack.c.l.b16 %v217
    %v304 = vunpack.c.h.b16 %v217
    %v305 = vunpack.c.l.b16 %v218
    %v306 = vunpack.c.h.b16 %v218
    %v307 = vunpack.c.l.b16 %v219
    %v308 = vunpack.c.h.b16 %v219
    %v309 = vunpack.c.l.b16 %v220
    %v310 = vunpack.c.h.b16 %v220
    %v311 = vunpack.c.l.b16 %v221
    %v312 = vunpack.c.h.b16 %v221
    %v313 = vunpack.c.l.b16 %v222
    %v314 = vunpack.c.h.b16 %v222
    %v315 = vunpack.c.l.b16 %v223
    %v316 = vunpack.c.h.b16 %v223
    %v317 = vunpack.c.l.b16 %v224
    %v318 = vunpack.c.h.b16 %v224
    %v319 = vunpack.c.l.b16 %v225
    %v320 = vunpack.c.h.b16 %v225
    %v321 = vunpack.c.l.b16 %v226
    %v322 = vunpack.c.h.b16 %v226
    %v323 = vunpack.c.l.b16 %v227
    %v324 = vunpack.c.h.b16 %v227
    %v325 = vunpack.c.l.b16 %v228
    %v326 = vunpack.c.h.b16 %v228
    %v327 = vunpack.c.l.b16 %v229
    %v328 = vunpack.c.h.b16 %v229
    %v329 = vunpack.c.l.b16 %v230
    %v330 = vunpack.c.h.b16 %v230
    %v331 = vunpack.c.l.b16 %v231
    %v332 = vunpack.c.h.b16 %v231
    %v333 = vunpack.c.l.b16 %v232
    %v334 = vunpack.c.h.b16 %v232
    %v335 = vunpack.c.l.b16 %v233
    %v336 = vunpack.c.h.b16 %v233
    %v337 = vunpack.c.l.b16 %v234
    %v338 = vunpack.c.h.b16 %v234
    %v339 = vunpack.c.l.b16 %v235
    %v340 = vunpack.c.h.b16 %v235
    %v341 = vunpack.c.l.b16 %v236
    %v342 = vunpack.c.h.b16 %v236
    %v343 = vunpack.c.l.b16 %v237
    %v344 = vunpack.c.h.b16 %v237
    %v345 = vunpack.c.l.b16 %v238
    %v346 = vunpack.c.h.b16 %v238
    %v347 = vpack.c.b16 %v285, %v283
    %v348 = vpack.c.b16 %v286, %v284
    %v349 = vpack.c.b16 %v289, %v287
    %v350 = vpack.c.b16 %v290, %v288
    %v351 = vpack.c.b16 %v293, %v291
    %v352 = vpack.c.b16 %v294, %v292
    %v353 = vpack.c.b16 %v297, %v295
    %v354 = vpack.c.b16 %v298, %v296
    %v355 = vpack.c.b16 %v301, %v299
    %v356 = vpack.c.b16 %v302, %v300
    %v357 = vpack.c.b16 %v305, %v303
    %v358 = vpack.c.b16 %v306, %v304
    %v359 = vpack.c.b16 %v309, %v307
    %v360 = vpack.c.b16 %v310, %v308
    %v361 = vpack.c.b16 %v313, %v311
    %v362 = vpack.c.b16 %v314, %v312
    %v363 = vpack.c.b16 %v317, %v315
    %v364 = vpack.c.b16 %v318, %v316
    %v365 = vpack.c.b16 %v321, %v319
    %v366 = vpack.c.b16 %v322, %v320
    %v367 = vpack.c.b16 %v325, %v323
    %v368 = vpack.c.b16 %v326, %v324
    %v369 = vpack.c.b16 %v329, %v327
    %v370 = vpack.c.b16 %v330, %v328
    %v371 = vpack.c.b16 %v333, %v331
    %v372 = vpack.c.b16 %v334, %v332
    %v373 = vpack.c.b16 %v337, %v335
    %v374 = vpack.c.b16 %v338, %v336
    %v375 = vpack.c.b16 %v341, %v339
    %v376 = vpack.c.b16 %v342, %v340
    %v377 = vpack.c.b16 %v345, %v343
    %v378 = vpack.c.b16 %v346, %v344
    %411 = vmatprep.subr.bf16.mxu0 %v362
    %412 = vmatpush1.bf16.msra.mxu0 %v361
    %413 = vmatprep.subr.bf16.mxu0 %v360
    %414 = vmatpush1.bf16.msra.mxu0 %v359
    %415 = vmatprep.subr.bf16.mxu0 %v358
    %416 = vmatpush1.bf16.msra.mxu0 %v357
    %417 = vmatprep.subr.bf16.mxu0 %v356
    %418 = vmatpush1.bf16.msra.mxu0 %v355
    %419 = vmatprep.subr.bf16.mxu0 %v354
    %420 = vmatpush1.bf16.msra.mxu0 %v353
    %421 = vmatprep.subr.bf16.mxu0 %v352
    %422 = vmatpush1.bf16.msra.mxu0 %v351
    %423 = vmatprep.subr.bf16.mxu0 %v350
    %424 = vmatpush1.bf16.msra.mxu0 %v349
    %425 = vmatprep.subr.bf16.mxu0 %v348
    %426 = vmatpush1.bf16.msra.mxu0 %v347
    %427 = vmatprep.subr.bf16.mxu0 %v378
    %428 = vmatpush2.bf16.msra.mxu0 %v377
    %429 = vmatprep.subr.bf16.mxu0 %v376
    %430 = vmatpush2.bf16.msra.mxu0 %v375
    %431 = vmatprep.subr.bf16.mxu0 %v374
    %432 = vmatpush2.bf16.msra.mxu0 %v373
    %433 = vmatprep.subr.bf16.mxu0 %v372
    %434 = vmatpush2.bf16.msra.mxu0 %v371
    %435 = vmatprep.subr.bf16.mxu0 %v370
    %436 = vmatpush2.bf16.msra.mxu0 %v369
    %437 = vmatprep.subr.bf16.mxu0 %v368
    %438 = vmatpush2.bf16.msra.mxu0 %v367
    %439 = vmatprep.subr.bf16.mxu0 %v366
    %440 = vmatpush2.bf16.msra.mxu0 %v365
    %441 = vmatprep.subr.bf16.mxu0 %v364
    %442 = vmatpush2.bf16.msra.mxu0 %v363
    %443 = vmatprep.mubr.bf16.mxu0 %v206
    %444 = vmatmul.mubr.bf16.gmra.mxu0 %v205
    %v445 = vpop.f32.mrf.mxu0
    %v446 = vadd.f32 %v244, %v445
    %v447 = vpop.f32.mrf.mxu0
    %v448 = vadd.f32 %v248, %v447
    %v449 = vpop.f32.mrf.mxu0
    %v450 = vpop.f32.mrf.mxu0
    %451 = vdwg.mxu0
    %v452 = vadd.f32 %v446, %v189
    %v453 = vadd.f32 %v448, %v191
    %v454 = vadd.f32 %v452, %v453
    %455 = vadd.xlane.f32.xlu0 %v454
    %v456 = vpop.xlane.xlu0 %455
    %v457 = vrcp.pop 256.0
    %v458 = vmul.f32 %v456, %v457
    %v459 = vsub.f32 %v452, %v458
    %v460 = vsub.f32 %v453, %v458
    %v461 = vmul.f32 %v459, %v459
    %v462 = vmul.f32 %v460, %v460
    %v463 = vadd.f32 %v461, %v462
    %464 = vadd.xlane.f32.xlu0 %v463
    %v465 = vpop.xlane.xlu0 %464
    %v466 = vmul.f32 %v465, %v457
    %v467 = vadd.f32 %v466, 1e-05
    %v468 = vrsqrt.pop %v467
    %v469 = vmul.f32 %v459, %v468
    %v470 = vmul.f32 %v460, %v468
    %v471 = vld [vmem:[%s5] sm:$0x3]
    %v473 = vlaneseq
    %v474 = vshrl.u32 %v473, 7
    %v475 = vsub.s32 0, %v474
    %v476 = vrot.slane %v471, %v475
    %v477 = vlaneseq
    %v478 = vshrl.u32 %v477, 7
    %v479 = vsub.s32 1, %v478
    %v480 = vrot.slane %v471, %v479
    %v483 = vmul.f32 %v469, %v476
    %v484 = vmul.f32 %v470, %v480
    %v485 = vld [vmem:[%s6] sm:$0x3]
    %v487 = vlaneseq
    %v488 = vshrl.u32 %v487, 7
    %v489 = vsub.s32 0, %v488
    %v490 = vrot.slane %v485, %v489
    %v491 = vlaneseq
    %v492 = vshrl.u32 %v491, 7
    %v493 = vsub.s32 1, %v492
    %v494 = vrot.slane %v485, %v493
    %v497 = vadd.f32 %v483, %v490
    %v498 = vadd.f32 %v484, %v494
    %499 = vst [vmem:[#allocation9] sm:$0xff] %v497
    %500 = vst [vmem:[#allocation9 + $0x8] sm:$0xff] %v498
    %v501 = vld [vmem:[%s7] sm:$0x3]
    %v503 = vlaneseq
    %v504 = vshrl.u32 %v503, 7
    %v505 = vsub.s32 0, %v504
    %v506 = vrot.slane %v501, %v505
    %v507 = vlaneseq
    %v508 = vshrl.u32 %v507, 7
    %v509 = vsub.s32 1, %v508
    %v510 = vrot.slane %v501, %v509
    %v513 = vmul.f32 %v497, %v506
    %v514 = vmul.f32 %v498, %v510
    %v515 = vadd.f32 %v513, %v514
    %516 = vadd.xlane.f32.xlu0 %v515
    %v517 = vpop.xlane.xlu0 %516
    %s518 = sld [smem:[#allocation2]]
    %v519 = vstv %s518
    %v520 = vadd.f32 %v517, %v519
    %vm521 = vcmask 7168
    %522 = vst.msk [vmem:[%s10] sm:$0xff] %vm521, %v520
    // Predicated region
    $region50: #{tpu_custom_call.1} parent=1 // pred_check
      _
    $region51: #{tpu_custom_call.1} parent=1 // pred_check_branch
      %524 = sbr.rel (0) target = $region53
    $region52: #{tpu_custom_call.1} parent=1 // pred_region
      %s526 = ssub.s32 256, 256
      %527 = vsyncadd [#allocation5], %s526
      %s529 = sshll.u32 [#allocation9], 4
      %s530 = int_to_ptr.vmem [resolvable:$true] %s529
      %532 = dma.vmem_to_hbm [thread:$0]  %s530, 256, %s9, [#allocation5]
    $region53: #{tpu_custom_call.1} parent=1 // pred_fallthru
      _
    // Predicated region
    $region54: #{tpu_custom_call.1} parent=1 // pred_check
      _
    $region55: #{tpu_custom_call.1} parent=1 // pred_check_branch
      %534 = sbr.rel (0) target = $region57
    $region56: #{tpu_custom_call.1} parent=1 // pred_region
      _
    $region57: #{tpu_custom_call.1} parent=1 // pred_fallthru
      _
    // Predicated region
    $region58: #{tpu_custom_call.1} parent=1 // pred_check
      _
    $region59: #{tpu_custom_call.1} parent=1 // pred_check_branch
      %536 = sbr.rel (0) target = $region61
    $region60: #{tpu_custom_call.1} parent=1 // pred_region
      %537 = dma.done [#allocation5], 256
    $region61: #{tpu_custom_call.1} parent=1 // pred_fallthru
      _
    // Predicated region
    $region62: #{tpu_custom_call.1} parent=1 // pred_check
      _
    $region63: #{tpu_custom_call.1} parent=1 // pred_check_branch
      %539 = sbr.rel (0) target = $region65
    $region64: #{tpu_custom_call.1} parent=1 // pred_region
      _
    $region65: #{tpu_custom_call.1} parent=1 // pred_fallthru
      _
    %540 = vsyncpa [#allocation4], 1
    %541 = vsyncpa [#allocation7], 1
    %542 = vsyncpa [#allocation5], 1

</llo_original>
